<compile_context>
chip_gen: v5e
topology: v5e:2x2
jax: 0.10.0
libtpu: 0.0.40
codegen_flags: <defaults>
</compile_context>

<pallas_src>
import jax
import jax.numpy as jnp
from jax import lax
from jax.experimental import pallas as pl
from jax.experimental.pallas import tpu as pltpu


def lstm_classifier_kernel(ids_ref, wih_ref, bcomb_ref, whh_ref, wdec_ref,
                           bdec_ref, out_ref):
    """Fused one-hot-embed -> LSTM -> binary decoder.

    ids_ref:   (T*B, 1) int32, time-major flattened ids (n = t*B + b)   [VMEM]
    wih_ref:   (E, 4H)  f32, input weights, x @ W.T layout, gates [f,i,g,o]
    bcomb_ref: (1, 4H)  f32, b_ih + b_hh (gate-reordered)
    whh_ref:   (H, 4H)  bf16, recurrent weights (gate-reordered)
    wdec_ref:  (1, H)   f32, binary-decoder weight row
    bdec_ref:  (1, 1)   f32, binary-decoder bias                          [SMEM]
    out_ref:   (B, 1)   f32 logits
    """
    B = out_ref.shape[0]
    TB = ids_ref.shape[0]
    T = TB // B
    E = wih_ref.shape[0]
    H = whh_ref.shape[0]

    # ---- fused one-hot embedding + input projection (off the serial chain) --
    # onehot[n, e] = (ids[n] == e); ids >= E correctly produce a zero row,
    # matching embeddings.weight = eye(max(V, E))[:V, :E] for any V.
    ids = ids_ref[...]                                           # (T*B, 1) i32
    onehot = (lax.broadcasted_iota(jnp.int32, (TB, E), 1) == ids
              ).astype(jnp.float32)                              # (T*B, E)
    gx = jnp.dot(onehot, wih_ref[...],
                 preferred_element_type=jnp.float32) + bcomb_ref[...]  # (T*B,4H)

    w_hh = whh_ref[...]              # (H, 4H) bf16, hoisted, vreg-resident
    b_dec = bdec_ref[0, 0]           # scalar from SMEM

    h = jnp.zeros((B, H), jnp.float32)
    c = jnp.zeros((B, H), jnp.float32)

    # Fully unrolled recurrence (T static); gx slices are tile-aligned vregs.
    for t in range(T):
        gx_t = gx[t * B:(t + 1) * B, :]                          # (B, 4H)
        gates = gx_t + jnp.dot(h.astype(jnp.bfloat16), w_hh,
                               preferred_element_type=jnp.float32)
        sig = jax.nn.sigmoid(gates)      # one whole-vreg EUP pass (4H = 128)
        tnh = jnp.tanh(gates)            # one whole-vreg EUP pass
        # gate order [f, i, g, o]: f lane-aligned with c (no rotate on f*c)
        f_g = sig[:, 0 * H:1 * H]
        i_g = sig[:, 1 * H:2 * H]
        g_g = tnh[:, 2 * H:3 * H]
        o_g = sig[:, 3 * H:4 * H]
        c = f_g * c + i_g * g_g
        h = o_g * jnp.tanh(c)

    # binary decoder: width-1 output -> VPU multiply + lane reduce, skip MXU
    out_ref[...] = (jnp.sum(h * wdec_ref[...], axis=-1, keepdims=True) + b_dec)


def _reorder_gates(m):
    """PyTorch LSTM gate blocks [i, f, g, o] (axis 0) -> [f, i, g, o]."""
    i, f, g, o = jnp.split(m, 4, axis=0)
    return jnp.concatenate([f, i, g, o], axis=0)


def pack_lstm_classifier_params(w_ih, w_hh, b_ih, b_hh, w_dec, b_dec):
    """Repack PyTorch-layout LSTM/decoder params for the kernel (done once)."""
    w_ih_t = jnp.asarray(_reorder_gates(w_ih).T, jnp.float32)         # (E, 4H)
    w_hh_bf = jnp.asarray(_reorder_gates(w_hh).T, jnp.bfloat16)       # (H, 4H)
    b_comb = jnp.asarray(_reorder_gates(b_ih + b_hh)[None, :], jnp.float32)
    w_dec_row = jnp.asarray(w_dec, jnp.float32).reshape(1, -1)        # (1, H)
    b_dec_2d = jnp.asarray(b_dec, jnp.float32).reshape(1, 1)          # (1, 1)
    return w_ih_t, b_comb, w_hh_bf, w_dec_row, b_dec_2d


@jax.jit
def lstm_language_classifier(input_ids, w_ih_t, b_comb, w_hh_bf, w_dec_row,
                             b_dec_2d):
    """input_ids: (B, T) int32 -> (B,) f32 logits (LanguageClassifier.forward)."""
    B, T = input_ids.shape
    # Only the tiny (B, T) int32 ids are rearranged in XLA; everything else is
    # fused into the kernel.  Time-major flat index n = t*B + b.
    ids_tm = input_ids.T.reshape(T * B, 1).astype(jnp.int32)

    out = pl.pallas_call(
        lstm_classifier_kernel,
        out_shape=jax.ShapeDtypeStruct((B, 1), jnp.float32),
        in_specs=[
            pl.BlockSpec(memory_space=pltpu.MemorySpace.VMEM),   # ids (T*B, 1)
            pl.BlockSpec(memory_space=pltpu.MemorySpace.VMEM),   # w_ih_t
            pl.BlockSpec(memory_space=pltpu.MemorySpace.VMEM),   # b_comb
            pl.BlockSpec(memory_space=pltpu.MemorySpace.VMEM),   # w_hh (bf16)
            pl.BlockSpec(memory_space=pltpu.MemorySpace.VMEM),   # w_dec
            pl.BlockSpec(memory_space=pltpu.MemorySpace.SMEM),   # b_dec scalar
        ],
        out_specs=pl.BlockSpec(memory_space=pltpu.MemorySpace.VMEM),
    )(ids_tm, w_ih_t, b_comb, w_hh_bf, w_dec_row, b_dec_2d)
    return out[:, 0]                       # contiguous (B,1)->(B,) squeeze(1)


def reference_forward(input_ids, emb_weight, w_ih, w_hh, b_ih, b_hh, w_dec,
                      b_dec, recurrent_dtype=jnp.float32):
    """Pure-JAX reference mirroring the PyTorch module (gate order i,f,g,o)."""
    B, T = input_ids.shape
    H = w_hh.shape[1]
    x = emb_weight[input_ids]                                   # (B, T, E)
    w_ih_t, w_hh_t, b = w_ih.T, w_hh.T, b_ih + b_hh

    def step(carry, x_t):
        h, c = carry
        rec = jnp.dot(h.astype(recurrent_dtype), w_hh_t.astype(recurrent_dtype),
                      preferred_element_type=jnp.float32,
                      precision=jax.lax.Precision.HIGHEST)
        gates = jnp.dot(x_t, w_ih_t,
                        precision=jax.lax.Precision.HIGHEST) + rec + b
        i_g = jax.nn.sigmoid(gates[:, 0 * H:1 * H])
        f_g = jax.nn.sigmoid(gates[:, 1 * H:2 * H])
        g_g = jnp.tanh(gates[:, 2 * H:3 * H])
        o_g = jax.nn.sigmoid(gates[:, 3 * H:4 * H])
        c_new = f_g * c + i_g * g_g
        h_new = o_g * jnp.tanh(c_new)
        return (h_new, c_new), None

    init = (jnp.zeros((B, H), jnp.float32), jnp.zeros((B, H), jnp.float32))
    (h_last, _), _ = lax.scan(step, init, jnp.transpose(x, (1, 0, 2)))
    return jnp.sum(h_last * w_dec, axis=-1) + b_dec[0]


if __name__ == "__main__":
    # ModelConfig: encoder='lstm', vocab_size=32, emb_dim=32, nhid=32,
    # num_layers=1, is_binary=True, one_hot_embedding=True, pad_idx=None
    vocab_size, emb_dim, nhid = 32, 32, 32
    B, T = 8, 8

    key = jax.random.PRNGKey(0)
    k_ids, k_wih, k_whh, k_bih, k_bhh, k_wd, k_bd = jax.random.split(key, 7)

    # --- deterministic parameter init (matching the module's __init__) ------
    # one_hot_embedding: weight = eye(max(vocab, emb))[:vocab, :emb]
    emb_weight = jnp.eye(max(vocab_size, emb_dim),
                         dtype=jnp.float32)[:vocab_size, :emb_dim]
    k = 1.0 / jnp.sqrt(nhid)
    w_ih = jax.random.uniform(k_wih, (4 * nhid, emb_dim), minval=-k, maxval=k)
    w_hh = jax.random.uniform(k_whh, (4 * nhid, nhid), minval=-k, maxval=k)
    b_ih = jax.random.uniform(k_bih, (4 * nhid,), minval=-k, maxval=k)
    b_hh = jax.random.uniform(k_bhh, (4 * nhid,), minval=-k, maxval=k)
    # binary_decoder = nn.Linear(nhid, 1); init_weights: weight ~ U(-0.1, 0.1)
    w_dec = jax.random.uniform(k_wd, (1, nhid), minval=-0.1, maxval=0.1)
    b_dec = jax.random.uniform(k_bd, (1,), minval=-k, maxval=k)

    packed = pack_lstm_classifier_params(w_ih, w_hh, b_ih, b_hh, w_dec, b_dec)

    # --- example inputs ------------------------------------------------------
    input_ids = jax.random.randint(k_ids, (B, T), 0, vocab_size)

    preds = lstm_language_classifier(input_ids, *packed)
    preds = jax.block_until_ready(preds)
    assert preds.shape == (B,)

    # Tight check: reference with the same bf16 recurrent-matmul operands
    # (validates the fused kernel logic / gate reordering).
    ref_bf16 = reference_forward(input_ids, emb_weight, w_ih, w_hh, b_ih, b_hh,
                                 w_dec, b_dec, recurrent_dtype=jnp.bfloat16)
    assert jnp.allclose(preds, ref_bf16, atol=5e-3), (preds, ref_bf16)

    # Fidelity check vs the full-f32 module semantics (bf16 recurrent matmul
    # introduces only a small deviation over the T=8 recurrence).
    ref_f32 = reference_forward(input_ids, emb_weight, w_ih, w_hh, b_ih, b_hh,
                                w_dec, b_dec, recurrent_dtype=jnp.float32)
    assert jnp.allclose(preds, ref_f32, atol=3e-2), (preds, ref_f32)

    print("KERNEL_OK")
</pallas_src>

<mosaic_0001>
module attributes {stable_mosaic.version = 11 : i64} {
  func.func @lstm_classifier_kernel(%arg0: memref<64x1xi32, #tpu.memory_space<vmem>>, %arg1: memref<32x128xf32, #tpu.memory_space<vmem>>, %arg2: memref<1x128xf32, #tpu.memory_space<vmem>>, %arg3: memref<32x128xbf16, #tpu.memory_space<vmem>>, %arg4: memref<1x32xf32, #tpu.memory_space<vmem>>, %arg5: memref<1x1xf32, #tpu.memory_space<smem>>, %arg6: memref<8x1xf32, #tpu.memory_space<vmem>>) attributes {dimension_semantics = [], scalar_prefetch = 0 : i64, scratch_operands = 0 : i64, tpu.core_type = #tpu.core_type<tc>} {
    %c0 = arith.constant 0 : index
    %c0_0 = arith.constant 0 : index
    %0 = vector.load %arg0[%c0, %c0_0] : memref<64x1xi32, #tpu.memory_space<vmem>>, vector<64x1xi32>
    %1 = tpu.iota {dimensions = array<i32: 1>} : vector<64x32xi32>
    %2 = vector.broadcast %0 : vector<64x1xi32> to vector<64x32xi32>
    %3 = arith.cmpi eq, %1, %2 : vector<64x32xi32>
    %4 = arith.extui %3 : vector<64x32xi1> to vector<64x32xi32>
    %5 = arith.sitofp %4 : vector<64x32xi32> to vector<64x32xf32>
    %c0_1 = arith.constant 0 : index
    %c0_2 = arith.constant 0 : index
    %6 = vector.load %arg1[%c0_1, %c0_2] : memref<32x128xf32, #tpu.memory_space<vmem>>, vector<32x128xf32>
    %cst = arith.constant dense<0.000000e+00> : vector<64x128xf32>
    %7 = tpu.matmul %5, %6, %cst {dimension_numbers = #tpu.dot_dimension_numbers<[1], [0], [0], [1], [0, 0, 1, 1], [], []>} : vector<64x32xf32>, vector<32x128xf32>, vector<64x128xf32> -> vector<64x128xf32>
    %c0_3 = arith.constant 0 : index
    %c0_4 = arith.constant 0 : index
    %8 = vector.load %arg2[%c0_3, %c0_4] : memref<1x128xf32, #tpu.memory_space<vmem>>, vector<1x128xf32>
    %9 = vector.broadcast %8 : vector<1x128xf32> to vector<64x128xf32>
    %10 = arith.addf %7, %9 : vector<64x128xf32>
    %c0_5 = arith.constant 0 : index
    %c0_6 = arith.constant 0 : index
    %11 = vector.load %arg3[%c0_5, %c0_6] : memref<32x128xbf16, #tpu.memory_space<vmem>>, vector<32x128xbf16>
    %c0_7 = arith.constant 0 : index
    %c0_8 = arith.constant 0 : index
    %12 = memref.load %arg5[%c0_7, %c0_8] : memref<1x1xf32, #tpu.memory_space<smem>>
    %cst_9 = arith.constant 0.000000e+00 : f32
    %13 = vector.broadcast %cst_9 : f32 to vector<8x32xf32>
    %cst_10 = arith.constant 0.000000e+00 : f32
    %14 = vector.broadcast %cst_10 : f32 to vector<8x32xf32>
    %15 = vector.extract_strided_slice %10 {offsets = [0, 0], sizes = [8, 128], strides = [1, 1]} : vector<64x128xf32> to vector<8x128xf32>
    %16 = arith.truncf %13 : vector<8x32xf32> to vector<8x32xbf16>
    %cst_11 = arith.constant dense<0.000000e+00> : vector<8x128xf32>
    %17 = tpu.matmul %16, %11, %cst_11 {dimension_numbers = #tpu.dot_dimension_numbers<[1], [0], [0], [1], [0, 0, 1, 1], [], []>} : vector<8x32xbf16>, vector<32x128xbf16>, vector<8x128xf32> -> vector<8x128xf32>
    %18 = arith.addf %15, %17 : vector<8x128xf32>
    %19 = arith.negf %18 : vector<8x128xf32>
    %20 = math.exp %19 : vector<8x128xf32>
    %cst_12 = arith.constant 1.000000e+00 : f32
    %21 = vector.broadcast %cst_12 : f32 to vector<8x128xf32>
    %22 = arith.addf %21, %20 : vector<8x128xf32>
    %23 = arith.divf %21, %22 : vector<8x128xf32>
    %24 = math.tanh %18 : vector<8x128xf32>
    %25 = vector.extract_strided_slice %23 {offsets = [0, 0], sizes = [8, 32], strides = [1, 1]} : vector<8x128xf32> to vector<8x32xf32>
    %26 = vector.extract_strided_slice %23 {offsets = [0, 32], sizes = [8, 32], strides = [1, 1]} : vector<8x128xf32> to vector<8x32xf32>
    %27 = vector.extract_strided_slice %24 {offsets = [0, 64], sizes = [8, 32], strides = [1, 1]} : vector<8x128xf32> to vector<8x32xf32>
    %28 = vector.extract_strided_slice %23 {offsets = [0, 96], sizes = [8, 32], strides = [1, 1]} : vector<8x128xf32> to vector<8x32xf32>
    %29 = arith.mulf %25, %14 : vector<8x32xf32>
    %30 = arith.mulf %26, %27 : vector<8x32xf32>
    %31 = arith.addf %29, %30 : vector<8x32xf32>
    %32 = math.tanh %31 : vector<8x32xf32>
    %33 = arith.mulf %28, %32 : vector<8x32xf32>
    %34 = vector.extract_strided_slice %10 {offsets = [8, 0], sizes = [8, 128], strides = [1, 1]} : vector<64x128xf32> to vector<8x128xf32>
    %35 = arith.truncf %33 : vector<8x32xf32> to vector<8x32xbf16>
    %cst_13 = arith.constant dense<0.000000e+00> : vector<8x128xf32>
    %36 = tpu.matmul %35, %11, %cst_13 {dimension_numbers = #tpu.dot_dimension_numbers<[1], [0], [0], [1], [0, 0, 1, 1], [], []>} : vector<8x32xbf16>, vector<32x128xbf16>, vector<8x128xf32> -> vector<8x128xf32>
    %37 = arith.addf %34, %36 : vector<8x128xf32>
    %38 = arith.negf %37 : vector<8x128xf32>
    %39 = math.exp %38 : vector<8x128xf32>
    %cst_14 = arith.constant 1.000000e+00 : f32
    %40 = vector.broadcast %cst_14 : f32 to vector<8x128xf32>
    %41 = arith.addf %40, %39 : vector<8x128xf32>
    %42 = arith.divf %40, %41 : vector<8x128xf32>
    %43 = math.tanh %37 : vector<8x128xf32>
    %44 = vector.extract_strided_slice %42 {offsets = [0, 0], sizes = [8, 32], strides = [1, 1]} : vector<8x128xf32> to vector<8x32xf32>
    %45 = vector.extract_strided_slice %42 {offsets = [0, 32], sizes = [8, 32], strides = [1, 1]} : vector<8x128xf32> to vector<8x32xf32>
    %46 = vector.extract_strided_slice %43 {offsets = [0, 64], sizes = [8, 32], strides = [1, 1]} : vector<8x128xf32> to vector<8x32xf32>
    %47 = vector.extract_strided_slice %42 {offsets = [0, 96], sizes = [8, 32], strides = [1, 1]} : vector<8x128xf32> to vector<8x32xf32>
    %48 = arith.mulf %44, %31 : vector<8x32xf32>
    %49 = arith.mulf %45, %46 : vector<8x32xf32>
    %50 = arith.addf %48, %49 : vector<8x32xf32>
    %51 = math.tanh %50 : vector<8x32xf32>
    %52 = arith.mulf %47, %51 : vector<8x32xf32>
    %53 = vector.extract_strided_slice %10 {offsets = [16, 0], sizes = [8, 128], strides = [1, 1]} : vector<64x128xf32> to vector<8x128xf32>
    %54 = arith.truncf %52 : vector<8x32xf32> to vector<8x32xbf16>
    %cst_15 = arith.constant dense<0.000000e+00> : vector<8x128xf32>
    %55 = tpu.matmul %54, %11, %cst_15 {dimension_numbers = #tpu.dot_dimension_numbers<[1], [0], [0], [1], [0, 0, 1, 1], [], []>} : vector<8x32xbf16>, vector<32x128xbf16>, vector<8x128xf32> -> vector<8x128xf32>
    %56 = arith.addf %53, %55 : vector<8x128xf32>
    %57 = arith.negf %56 : vector<8x128xf32>
    %58 = math.exp %57 : vector<8x128xf32>
    %cst_16 = arith.constant 1.000000e+00 : f32
    %59 = vector.broadcast %cst_16 : f32 to vector<8x128xf32>
    %60 = arith.addf %59, %58 : vector<8x128xf32>
    %61 = arith.divf %59, %60 : vector<8x128xf32>
    %62 = math.tanh %56 : vector<8x128xf32>
    %63 = vector.extract_strided_slice %61 {offsets = [0, 0], sizes = [8, 32], strides = [1, 1]} : vector<8x128xf32> to vector<8x32xf32>
    %64 = vector.extract_strided_slice %61 {offsets = [0, 32], sizes = [8, 32], strides = [1, 1]} : vector<8x128xf32> to vector<8x32xf32>
    %65 = vector.extract_strided_slice %62 {offsets = [0, 64], sizes = [8, 32], strides = [1, 1]} : vector<8x128xf32> to vector<8x32xf32>
    %66 = vector.extract_strided_slice %61 {offsets = [0, 96], sizes = [8, 32], strides = [1, 1]} : vector<8x128xf32> to vector<8x32xf32>
    %67 = arith.mulf %63, %50 : vector<8x32xf32>
    %68 = arith.mulf %64, %65 : vector<8x32xf32>
    %69 = arith.addf %67, %68 : vector<8x32xf32>
    %70 = math.tanh %69 : vector<8x32xf32>
    %71 = arith.mulf %66, %70 : vector<8x32xf32>
    %72 = vector.extract_strided_slice %10 {offsets = [24, 0], sizes = [8, 128], strides = [1, 1]} : vector<64x128xf32> to vector<8x128xf32>
    %73 = arith.truncf %71 : vector<8x32xf32> to vector<8x32xbf16>
    %cst_17 = arith.constant dense<0.000000e+00> : vector<8x128xf32>
    %74 = tpu.matmul %73, %11, %cst_17 {dimension_numbers = #tpu.dot_dimension_numbers<[1], [0], [0], [1], [0, 0, 1, 1], [], []>} : vector<8x32xbf16>, vector<32x128xbf16>, vector<8x128xf32> -> vector<8x128xf32>
    %75 = arith.addf %72, %74 : vector<8x128xf32>
    %76 = arith.negf %75 : vector<8x128xf32>
    %77 = math.exp %76 : vector<8x128xf32>
    %cst_18 = arith.constant 1.000000e+00 : f32
    %78 = vector.broadcast %cst_18 : f32 to vector<8x128xf32>
    %79 = arith.addf %78, %77 : vector<8x128xf32>
    %80 = arith.divf %78, %79 : vector<8x128xf32>
    %81 = math.tanh %75 : vector<8x128xf32>
    %82 = vector.extract_strided_slice %80 {offsets = [0, 0], sizes = [8, 32], strides = [1, 1]} : vector<8x128xf32> to vector<8x32xf32>
    %83 = vector.extract_strided_slice %80 {offsets = [0, 32], sizes = [8, 32], strides = [1, 1]} : vector<8x128xf32> to vector<8x32xf32>
    %84 = vector.extract_strided_slice %81 {offsets = [0, 64], sizes = [8, 32], strides = [1, 1]} : vector<8x128xf32> to vector<8x32xf32>
    %85 = vector.extract_strided_slice %80 {offsets = [0, 96], sizes = [8, 32], strides = [1, 1]} : vector<8x128xf32> to vector<8x32xf32>
    %86 = arith.mulf %82, %69 : vector<8x32xf32>
    %87 = arith.mulf %83, %84 : vector<8x32xf32>
    %88 = arith.addf %86, %87 : vector<8x32xf32>
    %89 = math.tanh %88 : vector<8x32xf32>
    %90 = arith.mulf %85, %89 : vector<8x32xf32>
    %91 = vector.extract_strided_slice %10 {offsets = [32, 0], sizes = [8, 128], strides = [1, 1]} : vector<64x128xf32> to vector<8x128xf32>
    %92 = arith.truncf %90 : vector<8x32xf32> to vector<8x32xbf16>
    %cst_19 = arith.constant dense<0.000000e+00> : vector<8x128xf32>
    %93 = tpu.matmul %92, %11, %cst_19 {dimension_numbers = #tpu.dot_dimension_numbers<[1], [0], [0], [1], [0, 0, 1, 1], [], []>} : vector<8x32xbf16>, vector<32x128xbf16>, vector<8x128xf32> -> vector<8x128xf32>
    %94 = arith.addf %91, %93 : vector<8x128xf32>
    %95 = arith.negf %94 : vector<8x128xf32>
    %96 = math.exp %95 : vector<8x128xf32>
    %cst_20 = arith.constant 1.000000e+00 : f32
    %97 = vector.broadcast %cst_20 : f32 to vector<8x128xf32>
    %98 = arith.addf %97, %96 : vector<8x128xf32>
    %99 = arith.divf %97, %98 : vector<8x128xf32>
    %100 = math.tanh %94 : vector<8x128xf32>
    %101 = vector.extract_strided_slice %99 {offsets = [0, 0], sizes = [8, 32], strides = [1, 1]} : vector<8x128xf32> to vector<8x32xf32>
    %102 = vector.extract_strided_slice %99 {offsets = [0, 32], sizes = [8, 32], strides = [1, 1]} : vector<8x128xf32> to vector<8x32xf32>
    %103 = vector.extract_strided_slice %100 {offsets = [0, 64], sizes = [8, 32], strides = [1, 1]} : vector<8x128xf32> to vector<8x32xf32>
    %104 = vector.extract_strided_slice %99 {offsets = [0, 96], sizes = [8, 32], strides = [1, 1]} : vector<8x128xf32> to vector<8x32xf32>
    %105 = arith.mulf %101, %88 : vector<8x32xf32>
    %106 = arith.mulf %102, %103 : vector<8x32xf32>
    %107 = arith.addf %105, %106 : vector<8x32xf32>
    %108 = math.tanh %107 : vector<8x32xf32>
    %109 = arith.mulf %104, %108 : vector<8x32xf32>
    %110 = vector.extract_strided_slice %10 {offsets = [40, 0], sizes = [8, 128], strides = [1, 1]} : vector<64x128xf32> to vector<8x128xf32>
    %111 = arith.truncf %109 : vector<8x32xf32> to vector<8x32xbf16>
    %cst_21 = arith.constant dense<0.000000e+00> : vector<8x128xf32>
    %112 = tpu.matmul %111, %11, %cst_21 {dimension_numbers = #tpu.dot_dimension_numbers<[1], [0], [0], [1], [0, 0, 1, 1], [], []>} : vector<8x32xbf16>, vector<32x128xbf16>, vector<8x128xf32> -> vector<8x128xf32>
    %113 = arith.addf %110, %112 : vector<8x128xf32>
    %114 = arith.negf %113 : vector<8x128xf32>
    %115 = math.exp %114 : vector<8x128xf32>
    %cst_22 = arith.constant 1.000000e+00 : f32
    %116 = vector.broadcast %cst_22 : f32 to vector<8x128xf32>
    %117 = arith.addf %116, %115 : vector<8x128xf32>
    %118 = arith.divf %116, %117 : vector<8x128xf32>
    %119 = math.tanh %113 : vector<8x128xf32>
    %120 = vector.extract_strided_slice %118 {offsets = [0, 0], sizes = [8, 32], strides = [1, 1]} : vector<8x128xf32> to vector<8x32xf32>
    %121 = vector.extract_strided_slice %118 {offsets = [0, 32], sizes = [8, 32], strides = [1, 1]} : vector<8x128xf32> to vector<8x32xf32>
    %122 = vector.extract_strided_slice %119 {offsets = [0, 64], sizes = [8, 32], strides = [1, 1]} : vector<8x128xf32> to vector<8x32xf32>
    %123 = vector.extract_strided_slice %118 {offsets = [0, 96], sizes = [8, 32], strides = [1, 1]} : vector<8x128xf32> to vector<8x32xf32>
    %124 = arith.mulf %120, %107 : vector<8x32xf32>
    %125 = arith.mulf %121, %122 : vector<8x32xf32>
    %126 = arith.addf %124, %125 : vector<8x32xf32>
    %127 = math.tanh %126 : vector<8x32xf32>
    %128 = arith.mulf %123, %127 : vector<8x32xf32>
    %129 = vector.extract_strided_slice %10 {offsets = [48, 0], sizes = [8, 128], strides = [1, 1]} : vector<64x128xf32> to vector<8x128xf32>
    %130 = arith.truncf %128 : vector<8x32xf32> to vector<8x32xbf16>
    %cst_23 = arith.constant dense<0.000000e+00> : vector<8x128xf32>
    %131 = tpu.matmul %130, %11, %cst_23 {dimension_numbers = #tpu.dot_dimension_numbers<[1], [0], [0], [1], [0, 0, 1, 1], [], []>} : vector<8x32xbf16>, vector<32x128xbf16>, vector<8x128xf32> -> vector<8x128xf32>
    %132 = arith.addf %129, %131 : vector<8x128xf32>
    %133 = arith.negf %132 : vector<8x128xf32>
    %134 = math.exp %133 : vector<8x128xf32>
    %cst_24 = arith.constant 1.000000e+00 : f32
    %135 = vector.broadcast %cst_24 : f32 to vector<8x128xf32>
    %136 = arith.addf %135, %134 : vector<8x128xf32>
    %137 = arith.divf %135, %136 : vector<8x128xf32>
    %138 = math.tanh %132 : vector<8x128xf32>
    %139 = vector.extract_strided_slice %137 {offsets = [0, 0], sizes = [8, 32], strides = [1, 1]} : vector<8x128xf32> to vector<8x32xf32>
    %140 = vector.extract_strided_slice %137 {offsets = [0, 32], sizes = [8, 32], strides = [1, 1]} : vector<8x128xf32> to vector<8x32xf32>
    %141 = vector.extract_strided_slice %138 {offsets = [0, 64], sizes = [8, 32], strides = [1, 1]} : vector<8x128xf32> to vector<8x32xf32>
    %142 = vector.extract_strided_slice %137 {offsets = [0, 96], sizes = [8, 32], strides = [1, 1]} : vector<8x128xf32> to vector<8x32xf32>
    %143 = arith.mulf %139, %126 : vector<8x32xf32>
    %144 = arith.mulf %140, %141 : vector<8x32xf32>
    %145 = arith.addf %143, %144 : vector<8x32xf32>
    %146 = math.tanh %145 : vector<8x32xf32>
    %147 = arith.mulf %142, %146 : vector<8x32xf32>
    %148 = vector.extract_strided_slice %10 {offsets = [56, 0], sizes = [8, 128], strides = [1, 1]} : vector<64x128xf32> to vector<8x128xf32>
    %149 = arith.truncf %147 : vector<8x32xf32> to vector<8x32xbf16>
    %cst_25 = arith.constant dense<0.000000e+00> : vector<8x128xf32>
    %150 = tpu.matmul %149, %11, %cst_25 {dimension_numbers = #tpu.dot_dimension_numbers<[1], [0], [0], [1], [0, 0, 1, 1], [], []>} : vector<8x32xbf16>, vector<32x128xbf16>, vector<8x128xf32> -> vector<8x128xf32>
    %151 = arith.addf %148, %150 : vector<8x128xf32>
    %152 = arith.negf %151 : vector<8x128xf32>
    %153 = math.exp %152 : vector<8x128xf32>
    %cst_26 = arith.constant 1.000000e+00 : f32
    %154 = vector.broadcast %cst_26 : f32 to vector<8x128xf32>
    %155 = arith.addf %154, %153 : vector<8x128xf32>
    %156 = arith.divf %154, %155 : vector<8x128xf32>
    %157 = math.tanh %151 : vector<8x128xf32>
    %158 = vector.extract_strided_slice %156 {offsets = [0, 0], sizes = [8, 32], strides = [1, 1]} : vector<8x128xf32> to vector<8x32xf32>
    %159 = vector.extract_strided_slice %156 {offsets = [0, 32], sizes = [8, 32], strides = [1, 1]} : vector<8x128xf32> to vector<8x32xf32>
    %160 = vector.extract_strided_slice %157 {offsets = [0, 64], sizes = [8, 32], strides = [1, 1]} : vector<8x128xf32> to vector<8x32xf32>
    %161 = vector.extract_strided_slice %156 {offsets = [0, 96], sizes = [8, 32], strides = [1, 1]} : vector<8x128xf32> to vector<8x32xf32>
    %162 = arith.mulf %158, %145 : vector<8x32xf32>
    %163 = arith.mulf %159, %160 : vector<8x32xf32>
    %164 = arith.addf %162, %163 : vector<8x32xf32>
    %165 = math.tanh %164 : vector<8x32xf32>
    %166 = arith.mulf %161, %165 : vector<8x32xf32>
    %c0_27 = arith.constant 0 : index
    %c0_28 = arith.constant 0 : index
    %167 = vector.load %arg4[%c0_27, %c0_28] : memref<1x32xf32, #tpu.memory_space<vmem>>, vector<1x32xf32>
    %168 = vector.broadcast %167 : vector<1x32xf32> to vector<8x32xf32>
    %169 = arith.mulf %166, %168 : vector<8x32xf32>
    %cst_29 = arith.constant dense<0.000000e+00> : vector<8xf32>
    %170 = vector.multi_reduction <add>, %169, %cst_29 [1] : vector<8x32xf32> to vector<8xf32>
    %171 = vector.shape_cast %170 : vector<8xf32> to vector<8x1xf32>
    %172 = vector.broadcast %12 : f32 to vector<8x1xf32>
    %173 = arith.addf %171, %172 : vector<8x1xf32>
    %c0_30 = arith.constant 0 : index
    %c0_31 = arith.constant 0 : index
    %174 = vector.load %arg6[%c0_30, %c0_31] : memref<8x1xf32, #tpu.memory_space<vmem>>, vector<8x1xf32>
    tpu.vector_store %arg6[%c0_30, %c0_31], %173 {strides = array<i32>} : memref<8x1xf32, #tpu.memory_space<vmem>>, vector<8x1xf32>,
    return
  }
}

</mosaic_0001>

<llo_original>
// kernel: lstm_language_classifier.1
$region0: #{lstm_language_classifier.1}
  #allocation0 [shape = 'u32[]', space=smem, size = 0x4, offset = 0x4, fixed_abs, tag = 'smem constant byte address 0x4 - core index']
  #allocation1 [shape = 'u32[72,128]{1,0:T(1,128)}', space=vmem, size = 0x9000, scoped, tag = 'internal scratch']
  #allocation2 [shape = 'f32[1,1]{1,0:T(1,128)S(6)}', space=smem, size = 0x200, scoped, tag = 'scoped memory for lstm_language_classifier.1']
  %s0 = inlined_call_operand.vmem [shape: s32[64,1], index: 0, kind: input, shape index: {}]
  %s1 = inlined_call_operand.vmem [shape: f32[32,128], index: 1, kind: input, shape index: {}]
  %s2 = inlined_call_operand.vmem [shape: f32[1,128], index: 2, kind: input, shape index: {}]
  %s3 = inlined_call_operand.vmem [shape: bf16[32,128], index: 3, kind: input, shape index: {}]
  %s4 = inlined_call_operand.vmem [shape: f32[1,32], index: 4, kind: input, shape index: {}]
  %s5 = inlined_call_operand.<no memory space> [shape: f32[1,1], index: 5, kind: input, shape index: {}]
  %s6 = inlined_call_operand.vmem [shape: f32[8,1], index: 6, kind: output, shape index: {}]
  %s7 = sld [smem:[#allocation0]]
  $region34: #{lstm_language_classifier.1} parent=0
    _
  %s9 = ssub.s32 1, %s7
  %s10 = scalar_select 0, %s9, %s7
  %11 = sst [smem:[#allocation2]] %s5
  // Predicated region
  $region2: #{lstm_language_classifier.1} parent=0 // pred_check
    _
  $region3: #{lstm_language_classifier.1} parent=0 // pred_check_branch
    %13 = sbr.rel (0) target = $region5
  $region4: #{lstm_language_classifier.1} parent=0 // pred_region
    _
  $region5: #{lstm_language_classifier.1} parent=0 // pred_fallthru
    _
  // Predicated region
  $region6: #{lstm_language_classifier.1} parent=0 // pred_check
    _
  $region7: #{lstm_language_classifier.1} parent=0 // pred_check_branch
    %15 = sbr.rel (0) target = $region9
  $region8: #{lstm_language_classifier.1} parent=0 // pred_region
    _
  $region9: #{lstm_language_classifier.1} parent=0 // pred_fallthru
    _
  // Predicated region
  $region10: #{lstm_language_classifier.1} parent=0 // pred_check
    _
  $region11: #{lstm_language_classifier.1} parent=0 // pred_check_branch
    %17 = sbr.rel (0) target = $region13
  $region12: #{lstm_language_classifier.1} parent=0 // pred_region
    _
  $region13: #{lstm_language_classifier.1} parent=0 // pred_fallthru
    _
  // Predicated region
  $region14: #{lstm_language_classifier.1} parent=0 // pred_check
    _
  $region15: #{lstm_language_classifier.1} parent=0 // pred_check_branch
    %19 = sbr.rel (0) target = $region17
  $region16: #{lstm_language_classifier.1} parent=0 // pred_region
    _
  $region17: #{lstm_language_classifier.1} parent=0 // pred_fallthru
    _
  // Predicated region
  $region18: #{lstm_language_classifier.1} parent=0 // pred_check
    _
  $region19: #{lstm_language_classifier.1} parent=0 // pred_check_branch
    %21 = sbr.rel (0) target = $region21
  $region20: #{lstm_language_classifier.1} parent=0 // pred_region
    _
  $region21: #{lstm_language_classifier.1} parent=0 // pred_fallthru
    _
  // Predicated region
  $region22: #{lstm_language_classifier.1} parent=0 // pred_check
    _
  $region23: #{lstm_language_classifier.1} parent=0 // pred_check_branch
    %23 = sbr.rel (0) target = $region25
  $region24: #{lstm_language_classifier.1} parent=0 // pred_region
    _
  $region25: #{lstm_language_classifier.1} parent=0 // pred_fallthru
    _
  %v25 = vld [vmem:[%s0] sm:$0xff]
  %v26 = vld [vmem:[%s0 + $0x8] sm:$0xff]
  %v27 = vld [vmem:[%s0 + $0x10] sm:$0xff]
  %v28 = vld [vmem:[%s0 + $0x18] sm:$0xff]
  %v29 = vld [vmem:[%s0 + $0x20] sm:$0xff]
  %v30 = vld [vmem:[%s0 + $0x28] sm:$0xff]
  %v31 = vld [vmem:[%s0 + $0x30] sm:$0xff]
  %v32 = vld [vmem:[%s0 + $0x38] sm:$0xff]
  %v33 = vlaneseq
  %v34 = vand.u32 %v33, 127
  %35 = vset.pattern.permute.xlu0 0
  %36 = vperm.xlu0 %35, %v25
  %v37 = vpop.permute.xlu0 %36
  %38 = vset.pattern.permute.xlu0 0
  %39 = vperm.xlu0 %38, %v26
  %v40 = vpop.permute.xlu0 %39
  %41 = vset.pattern.permute.xlu0 0
  %42 = vperm.xlu0 %41, %v27
  %v43 = vpop.permute.xlu0 %42
  %44 = vset.pattern.permute.xlu0 0
  %45 = vperm.xlu0 %44, %v28
  %v46 = vpop.permute.xlu0 %45
  %47 = vset.pattern.permute.xlu0 0
  %48 = vperm.xlu0 %47, %v29
  %v49 = vpop.permute.xlu0 %48
  %50 = vset.pattern.permute.xlu0 0
  %51 = vperm.xlu0 %50, %v30
  %v52 = vpop.permute.xlu0 %51
  %53 = vset.pattern.permute.xlu0 0
  %54 = vperm.xlu0 %53, %v31
  %v55 = vpop.permute.xlu0 %54
  %56 = vset.pattern.permute.xlu0 0
  %57 = vperm.xlu0 %56, %v32
  %v58 = vpop.permute.xlu0 %57
  %vm59 = vcmp.eq.s32.totalorder %v34, %v37
  %vm60 = vcmp.eq.s32.totalorder %v34, %v40
  %vm61 = vcmp.eq.s32.totalorder %v34, %v43
  %vm62 = vcmp.eq.s32.totalorder %v34, %v46
  %vm63 = vcmp.eq.s32.totalorder %v34, %v49
  %vm64 = vcmp.eq.s32.totalorder %v34, %v52
  %vm65 = vcmp.eq.s32.totalorder %v34, %v55
  %vm66 = vcmp.eq.s32.totalorder %v34, %v58
  %v67 = vsel %vm59, 1, 0
  %v68 = vsel %vm60, 1, 0
  %v69 = vsel %vm61, 1, 0
  %v70 = vsel %vm62, 1, 0
  %v71 = vsel %vm63, 1, 0
  %v72 = vsel %vm64, 1, 0
  %v73 = vsel %vm65, 1, 0
  %v74 = vsel %vm66, 1, 0
  %v75 = vcvt.s32.f32 %v67
  %v76 = vcvt.s32.f32 %v68
  %v77 = vcvt.s32.f32 %v69
  %v78 = vcvt.s32.f32 %v70
  %v79 = vcvt.s32.f32 %v71
  %v80 = vcvt.s32.f32 %v72
  %v81 = vcvt.s32.f32 %v73
  %v82 = vcvt.s32.f32 %v74
  %v83 = vld [vmem:[%s1] sm:$0xff]
  %v84 = vld [vmem:[%s1 + $0x8] sm:$0xff]
  %v85 = vld [vmem:[%s1 + $0x10] sm:$0xff]
  %v86 = vld [vmem:[%s1 + $0x18] sm:$0xff]
  %v87 = vld [vmem:[%s2] sm:$0x1]
  %v89 = vperm.slane %v87, 0
  %vm91 = vcmask 261120
  %v93 = vsel %vm91, %v75, 0
  %v96 = vsel %vm91, %v76, 0
  %v99 = vsel %vm91, %v77, 0
  %v102 = vsel %vm91, %v78, 0
  %v105 = vsel %vm91, %v79, 0
  %v108 = vsel %vm91, %v80, 0
  %v111 = vsel %vm91, %v81, 0
  %v114 = vsel %vm91, %v82, 0
  %116 = vmatpush.msra.mxu0 0.0
  %117 = vmatpush.msra.mxu0 0.0
  %118 = vmatpush.msra.mxu0 0.0
  %119 = vmatpush.msra.mxu0 0.0
  %120 = vmatpush.msra.mxu0 0.0
  %121 = vmatpush.msra.mxu0 0.0
  %122 = vmatpush.msra.mxu0 0.0
  %123 = vmatpush.msra.mxu0 0.0
  %124 = vmatpush.msra.mxu0 0.0
  %125 = vmatpush.msra.mxu0 0.0
  %126 = vmatpush.msra.mxu0 0.0
  %127 = vmatpush.msra.mxu0 0.0
  %128 = vmatpush.msra.mxu0 %v86
  %129 = vmatpush.msra.mxu0 %v85
  %130 = vmatpush.msra.mxu0 %v84
  %131 = vmatpush.msra.mxu0 %v83
  %132 = vmatmul.f32.gmra.mxu0 %v93
  %v133 = vpop.f32.mrf.mxu0
  %v134 = vadd.f32 %v89, %v133
  %135 = vmatmul.f32.gmra.mxu0 %v96
  %v136 = vpop.f32.mrf.mxu0
  %v137 = vadd.f32 %v89, %v136
  %138 = vmatmul.f32.gmra.mxu0 %v99
  %v139 = vpop.f32.mrf.mxu0
  %v140 = vadd.f32 %v89, %v139
  %141 = vmatmul.f32.gmra.mxu0 %v102
  %v142 = vpop.f32.mrf.mxu0
  %v143 = vadd.f32 %v89, %v142
  %144 = vmatmul.f32.gmra.mxu0 %v105
  %v145 = vpop.f32.mrf.mxu0
  %v146 = vadd.f32 %v89, %v145
  %147 = vmatmul.f32.gmra.mxu0 %v108
  %v148 = vpop.f32.mrf.mxu0
  %v149 = vadd.f32 %v89, %v148
  %150 = vmatmul.f32.gmra.mxu0 %v111
  %v151 = vpop.f32.mrf.mxu0
  %v152 = vadd.f32 %v89, %v151
  %153 = vmatmul.f32.gmra.mxu0 %v114
  %v154 = vpop.f32.mrf.mxu0
  %v155 = vadd.f32 %v89, %v154
  %156 = vdwg.mxu0
  %v157 = vld [vmem:[%s3] sm:$0xf]
  %v158 = vld [vmem:[%s3 + $0x4] sm:$0xf]
  %v159 = vld [vmem:[%s3 + $0x8] sm:$0xf]
  %v160 = vld [vmem:[%s3 + $0xc] sm:$0xf]
  %s161 = sld [smem:[#allocation2]]
  %v166 = vunpack.c.l.b16 %v157
  %v167 = vunpack.c.l.b16 %v158
  %v168 = vunpack.c.l.b16 %v159
  %v169 = vunpack.c.l.b16 %v160
  %v170 = vpack.c.b16 %v167, %v166
  %v171 = vpack.c.b16 %v169, %v168
  %v175 = vsel %vm91, 0, 0
  %177 = vmatpush.bf16.msra.mxu0 0
  %178 = vmatpush.bf16.msra.mxu0 0
  %179 = vmatpush.bf16.msra.mxu0 0
  %180 = vmatpush.bf16.msra.mxu0 0
  %181 = vmatpush.bf16.msra.mxu0 0
  %182 = vmatpush.bf16.msra.mxu0 0
  %183 = vmatpush.bf16.msra.mxu0 %v171
  %184 = vmatpush.bf16.msra.mxu0 %v170
  %185 = vmatmul.bf16.gmra.mxu0 %v175
  %v186 = vpop.f32.mrf.mxu0
  %v187 = vadd.f32 0.0, %v186
  %v188 = vpop.f32.mrf.mxu0
  %189 = vdwg.mxu0
  %v190 = vadd.f32 %v134, %v187
  %v191 = vxor.u32 %v190, 2147483648
  %v192 = vmul.f32 %v191, 1.442695
  %v193 = vpow.pop %v192
  %v194 = vadd.f32 %v193, 1.0
  %v195 = vrcp.pop %v194
  %v196 = vmul.f32 %v194, %v195
  %v197 = vsub.f32 1.0, %v196
  %v198 = vmul.f32 %v195, %v197
  %v199 = vadd.f32 %v195, %v198
  %vm200 = vweird.f32 %v194
  %vm201 = vweird.f32 %v195
  %vm202 = vmor %vm200, %vm201
  %v203 = vsel %vm202, %v195, %v199
  %v204 = vand.u32 2147483647, %v194
  %vm205 = vcmp.eq.f32.partialorder %v204, 8.507059e+37
  %v206 = vand.u32 %v194, 2147483648
  %v207 = vor.u32 1.1754944e-38, %v206
  %v208 = vsel %vm205, %v207, %v203
  %v209 = vmul.f32 1.0, %v208
  %v210 = vtanh.pop %v190
  %v211 = vmul.f32 %v209, 0.0
  %213 = vrot.lane.b32.xlu0 %v210, 96
  %v214 = vpop.permute.xlu0 %213
  %v216 = vmul.f32 %v209, %v214
  %218 = vrot.lane.b32.xlu0 %v216, 96
  %v219 = vpop.permute.xlu0 %218
  %v221 = vadd.f32 %v211, %v219
  %v222 = vtanh.pop %v221
  %224 = vrot.lane.b32.xlu0 %v222, 96
  %v225 = vpop.permute.xlu0 %224
  %v227 = vmul.f32 %v209, %v225
  %v228 = vpack.c.bf16 %v227, %v227
  %230 = vrot.lane.b32.xlu0 %v228, 32
  %v231 = vpop.permute.xlu0 %230
  %v233 = vsel %vm91, %v231, 0
  %235 = vmatpush.bf16.msra.mxu0 0
  %236 = vmatpush.bf16.msra.mxu0 0
  %237 = vmatpush.bf16.msra.mxu0 0
  %238 = vmatpush.bf16.msra.mxu0 0
  %239 = vmatpush.bf16.msra.mxu0 0
  %240 = vmatpush.bf16.msra.mxu0 0
  %241 = vmatpush.bf16.msra.mxu0 %v171
  %242 = vmatpush.bf16.msra.mxu0 %v170
  %243 = vmatmul.bf16.gmra.mxu0 %v233
  %v244 = vpop.f32.mrf.mxu0
  %v245 = vadd.f32 0.0, %v244
  %v246 = vpop.f32.mrf.mxu0
  %247 = vdwg.mxu0
  %v248 = vadd.f32 %v137, %v245
  %v249 = vxor.u32 %v248, 2147483648
  %v250 = vmul.f32 %v249, 1.442695
  %v251 = vpow.pop %v250
  %v252 = vadd.f32 %v251, 1.0
  %v253 = vrcp.pop %v252
  %v254 = vmul.f32 %v252, %v253
  %v255 = vsub.f32 1.0, %v254
  %v256 = vmul.f32 %v253, %v255
  %v257 = vadd.f32 %v253, %v256
  %vm258 = vweird.f32 %v252
  %vm259 = vweird.f32 %v253
  %vm260 = vmor %vm258, %vm259
  %v261 = vsel %vm260, %v253, %v257
  %v262 = vand.u32 2147483647, %v252
  %vm263 = vcmp.eq.f32.partialorder %v262, 8.507059e+37
  %v264 = vand.u32 %v252, 2147483648
  %v265 = vor.u32 1.1754944e-38, %v264
  %v266 = vsel %vm263, %v265, %v261
  %v267 = vmul.f32 1.0, %v266
  %v268 = vtanh.pop %v248
  %v269 = vmul.f32 %v267, %v221
  %271 = vrot.lane.b32.xlu0 %v268, 96
  %v272 = vpop.permute.xlu0 %271
  %v274 = vmul.f32 %v267, %v272
  %276 = vrot.lane.b32.xlu0 %v274, 96
  %v277 = vpop.permute.xlu0 %276
  %v279 = vadd.f32 %v269, %v277
  %v280 = vtanh.pop %v279
  %282 = vrot.lane.b32.xlu0 %v280, 96
  %v283 = vpop.permute.xlu0 %282
  %v285 = vmul.f32 %v267, %v283
  %v286 = vpack.c.bf16 %v285, %v285
  %288 = vrot.lane.b32.xlu0 %v286, 32
  %v289 = vpop.permute.xlu0 %288
  %v291 = vsel %vm91, %v289, 0
  %293 = vmatpush.bf16.msra.mxu0 0
  %294 = vmatpush.bf16.msra.mxu0 0
  %295 = vmatpush.bf16.msra.mxu0 0
  %296 = vmatpush.bf16.msra.mxu0 0
  %297 = vmatpush.bf16.msra.mxu0 0
  %298 = vmatpush.bf16.msra.mxu0 0
  %299 = vmatpush.bf16.msra.mxu0 %v171
  %300 = vmatpush.bf16.msra.mxu0 %v170
  %301 = vmatmul.bf16.gmra.mxu0 %v291
  %v302 = vpop.f32.mrf.mxu0
  %v303 = vadd.f32 0.0, %v302
  %v304 = vpop.f32.mrf.mxu0
  %305 = vdwg.mxu0
  %v306 = vadd.f32 %v140, %v303
  %v307 = vxor.u32 %v306, 2147483648
  %v308 = vmul.f32 %v307, 1.442695
  %v309 = vpow.pop %v308
  %v310 = vadd.f32 %v309, 1.0
  %v311 = vrcp.pop %v310
  %v312 = vmul.f32 %v310, %v311
  %v313 = vsub.f32 1.0, %v312
  %v314 = vmul.f32 %v311, %v313
  %v315 = vadd.f32 %v311, %v314
  %vm316 = vweird.f32 %v310
  %vm317 = vweird.f32 %v311
  %vm318 = vmor %vm316, %vm317
  %v319 = vsel %vm318, %v311, %v315
  %v320 = vand.u32 2147483647, %v310
  %vm321 = vcmp.eq.f32.partialorder %v320, 8.507059e+37
  %v322 = vand.u32 %v310, 2147483648
  %v323 = vor.u32 1.1754944e-38, %v322
  %v324 = vsel %vm321, %v323, %v319
  %v325 = vmul.f32 1.0, %v324
  %v326 = vtanh.pop %v306
  %v327 = vmul.f32 %v325, %v279
  %329 = vrot.lane.b32.xlu0 %v326, 96
  %v330 = vpop.permute.xlu0 %329
  %v332 = vmul.f32 %v325, %v330
  %334 = vrot.lane.b32.xlu0 %v332, 96
  %v335 = vpop.permute.xlu0 %334
  %v337 = vadd.f32 %v327, %v335
  %v338 = vtanh.pop %v337
  %340 = vrot.lane.b32.xlu0 %v338, 96
  %v341 = vpop.permute.xlu0 %340
  %v343 = vmul.f32 %v325, %v341
  %v344 = vpack.c.bf16 %v343, %v343
  %346 = vrot.lane.b32.xlu0 %v344, 32
  %v347 = vpop.permute.xlu0 %346
  %v349 = vsel %vm91, %v347, 0
  %351 = vmatpush.bf16.msra.mxu0 0
  %352 = vmatpush.bf16.msra.mxu0 0
  %353 = vmatpush.bf16.msra.mxu0 0
  %354 = vmatpush.bf16.msra.mxu0 0
  %355 = vmatpush.bf16.msra.mxu0 0
  %356 = vmatpush.bf16.msra.mxu0 0
  %357 = vmatpush.bf16.msra.mxu0 %v171
  %358 = vmatpush.bf16.msra.mxu0 %v170
  %359 = vmatmul.bf16.gmra.mxu0 %v349
  %v360 = vpop.f32.mrf.mxu0
  %v361 = vadd.f32 0.0, %v360
  %v362 = vpop.f32.mrf.mxu0
  %363 = vdwg.mxu0
  %v364 = vadd.f32 %v143, %v361
  %v365 = vxor.u32 %v364, 2147483648
  %v366 = vmul.f32 %v365, 1.442695
  %v367 = vpow.pop %v366
  %v368 = vadd.f32 %v367, 1.0
  %v369 = vrcp.pop %v368
  %v370 = vmul.f32 %v368, %v369
  %v371 = vsub.f32 1.0, %v370
  %v372 = vmul.f32 %v369, %v371
  %v373 = vadd.f32 %v369, %v372
  %vm374 = vweird.f32 %v368
  %vm375 = vweird.f32 %v369
  %vm376 = vmor %vm374, %vm375
  %v377 = vsel %vm376, %v369, %v373
  %v378 = vand.u32 2147483647, %v368
  %vm379 = vcmp.eq.f32.partialorder %v378, 8.507059e+37
  %v380 = vand.u32 %v368, 2147483648
  %v381 = vor.u32 1.1754944e-38, %v380
  %v382 = vsel %vm379, %v381, %v377
  %v383 = vmul.f32 1.0, %v382
  %v384 = vtanh.pop %v364
  %v385 = vmul.f32 %v383, %v337
  %387 = vrot.lane.b32.xlu0 %v384, 96
  %v388 = vpop.permute.xlu0 %387
  %v390 = vmul.f32 %v383, %v388
  %392 = vrot.lane.b32.xlu0 %v390, 96
  %v393 = vpop.permute.xlu0 %392
  %v395 = vadd.f32 %v385, %v393
  %v396 = vtanh.pop %v395
  %398 = vrot.lane.b32.xlu0 %v396, 96
  %v399 = vpop.permute.xlu0 %398
  %v401 = vmul.f32 %v383, %v399
  %v402 = vpack.c.bf16 %v401, %v401
  %404 = vrot.lane.b32.xlu0 %v402, 32
  %v405 = vpop.permute.xlu0 %404
  %v407 = vsel %vm91, %v405, 0
  %409 = vmatpush.bf16.msra.mxu0 0
  %410 = vmatpush.bf16.msra.mxu0 0
  %411 = vmatpush.bf16.msra.mxu0 0
  %412 = vmatpush.bf16.msra.mxu0 0
  %413 = vmatpush.bf16.msra.mxu0 0
  %414 = vmatpush.bf16.msra.mxu0 0
  %415 = vmatpush.bf16.msra.mxu0 %v171
  %416 = vmatpush.bf16.msra.mxu0 %v170
  %417 = vmatmul.bf16.gmra.mxu0 %v407
  %v418 = vpop.f32.mrf.mxu0
  %v419 = vadd.f32 0.0, %v418
  %v420 = vpop.f32.mrf.mxu0
  %421 = vdwg.mxu0
  %v422 = vadd.f32 %v146, %v419
  %v423 = vxor.u32 %v422, 2147483648
  %v424 = vmul.f32 %v423, 1.442695
  %v425 = vpow.pop %v424
  %v426 = vadd.f32 %v425, 1.0
  %v427 = vrcp.pop %v426
  %v428 = vmul.f32 %v426, %v427
  %v429 = vsub.f32 1.0, %v428
  %v430 = vmul.f32 %v427, %v429
  %v431 = vadd.f32 %v427, %v430
  %vm432 = vweird.f32 %v426
  %vm433 = vweird.f32 %v427
  %vm434 = vmor %vm432, %vm433
  %v435 = vsel %vm434, %v427, %v431
  %v436 = vand.u32 2147483647, %v426
  %vm437 = vcmp.eq.f32.partialorder %v436, 8.507059e+37
  %v438 = vand.u32 %v426, 2147483648
  %v439 = vor.u32 1.1754944e-38, %v438
  %v440 = vsel %vm437, %v439, %v435
  %v441 = vmul.f32 1.0, %v440
  %v442 = vtanh.pop %v422
  %v443 = vmul.f32 %v441, %v395
  %445 = vrot.lane.b32.xlu0 %v442, 96
  %v446 = vpop.permute.xlu0 %445
  %v448 = vmul.f32 %v441, %v446
  %450 = vrot.lane.b32.xlu0 %v448, 96
  %v451 = vpop.permute.xlu0 %450
  %v453 = vadd.f32 %v443, %v451
  %v454 = vtanh.pop %v453
  %456 = vrot.lane.b32.xlu0 %v454, 96
  %v457 = vpop.permute.xlu0 %456
  %v459 = vmul.f32 %v441, %v457
  %v460 = vpack.c.bf16 %v459, %v459
  %462 = vrot.lane.b32.xlu0 %v460, 32
  %v463 = vpop.permute.xlu0 %462
  %v465 = vsel %vm91, %v463, 0
  %467 = vmatpush.bf16.msra.mxu0 0
  %468 = vmatpush.bf16.msra.mxu0 0
  %469 = vmatpush.bf16.msra.mxu0 0
  %470 = vmatpush.bf16.msra.mxu0 0
  %471 = vmatpush.bf16.msra.mxu0 0
  %472 = vmatpush.bf16.msra.mxu0 0
  %473 = vmatpush.bf16.msra.mxu0 %v171
  %474 = vmatpush.bf16.msra.mxu0 %v170
  %475 = vmatmul.bf16.gmra.mxu0 %v465
  %v476 = vpop.f32.mrf.mxu0
  %v477 = vadd.f32 0.0, %v476
  %v478 = vpop.f32.mrf.mxu0
  %479 = vdwg.mxu0
  %v480 = vadd.f32 %v149, %v477
  %v481 = vxor.u32 %v480, 2147483648
  %v482 = vmul.f32 %v481, 1.442695
  %v483 = vpow.pop %v482
  %v484 = vadd.f32 %v483, 1.0
  %v485 = vrcp.pop %v484
  %v486 = vmul.f32 %v484, %v485
  %v487 = vsub.f32 1.0, %v486
  %v488 = vmul.f32 %v485, %v487
  %v489 = vadd.f32 %v485, %v488
  %vm490 = vweird.f32 %v484
  %vm491 = vweird.f32 %v485
  %vm492 = vmor %vm490, %vm491
  %v493 = vsel %vm492, %v485, %v489
  %v494 = vand.u32 2147483647, %v484
  %vm495 = vcmp.eq.f32.partialorder %v494, 8.507059e+37
  %v496 = vand.u32 %v484, 2147483648
  %v497 = vor.u32 1.1754944e-38, %v496
  %v498 = vsel %vm495, %v497, %v493
  %v499 = vmul.f32 1.0, %v498
  %v500 = vtanh.pop %v480
  %v501 = vmul.f32 %v499, %v453
  %503 = vrot.lane.b32.xlu0 %v500, 96
  %v504 = vpop.permute.xlu0 %503
  %v506 = vmul.f32 %v499, %v504
  %508 = vrot.lane.b32.xlu0 %v506, 96
  %v509 = vpop.permute.xlu0 %508
  %v511 = vadd.f32 %v501, %v509
  %v512 = vtanh.pop %v511
  %514 = vrot.lane.b32.xlu0 %v512, 96
  %v515 = vpop.permute.xlu0 %514
  %v517 = vmul.f32 %v499, %v515
  %v518 = vpack.c.bf16 %v517, %v517
  %520 = vrot.lane.b32.xlu0 %v518, 32
  %v521 = vpop.permute.xlu0 %520
  %v523 = vsel %vm91, %v521, 0
  %525 = vmatpush.bf16.msra.mxu0 0
  %526 = vmatpush.bf16.msra.mxu0 0
  %527 = vmatpush.bf16.msra.mxu0 0
  %528 = vmatpush.bf16.msra.mxu0 0
  %529 = vmatpush.bf16.msra.mxu0 0
  %530 = vmatpush.bf16.msra.mxu0 0
  %531 = vmatpush.bf16.msra.mxu0 %v171
  %532 = vmatpush.bf16.msra.mxu0 %v170
  %533 = vmatmul.bf16.gmra.mxu0 %v523
  %v534 = vpop.f32.mrf.mxu0
  %v535 = vadd.f32 0.0, %v534
  %v536 = vpop.f32.mrf.mxu0
  %537 = vdwg.mxu0
  %v538 = vadd.f32 %v152, %v535
  %v539 = vxor.u32 %v538, 2147483648
  %v540 = vmul.f32 %v539, 1.442695
  %v541 = vpow.pop %v540
  %v542 = vadd.f32 %v541, 1.0
  %v543 = vrcp.pop %v542
  %v544 = vmul.f32 %v542, %v543
  %v545 = vsub.f32 1.0, %v544
  %v546 = vmul.f32 %v543, %v545
  %v547 = vadd.f32 %v543, %v546
  %vm548 = vweird.f32 %v542
  %vm549 = vweird.f32 %v543
  %vm550 = vmor %vm548, %vm549
  %v551 = vsel %vm550, %v543, %v547
  %v552 = vand.u32 2147483647, %v542
  %vm553 = vcmp.eq.f32.partialorder %v552, 8.507059e+37
  %v554 = vand.u32 %v542, 2147483648
  %v555 = vor.u32 1.1754944e-38, %v554
  %v556 = vsel %vm553, %v555, %v551
  %v557 = vmul.f32 1.0, %v556
  %v558 = vtanh.pop %v538
  %v559 = vmul.f32 %v557, %v511
  %561 = vrot.lane.b32.xlu0 %v558, 96
  %v562 = vpop.permute.xlu0 %561
  %v564 = vmul.f32 %v557, %v562
  %566 = vrot.lane.b32.xlu0 %v564, 96
  %v567 = vpop.permute.xlu0 %566
  %v569 = vadd.f32 %v559, %v567
  %v570 = vtanh.pop %v569
  %572 = vrot.lane.b32.xlu0 %v570, 96
  %v573 = vpop.permute.xlu0 %572
  %v575 = vmul.f32 %v557, %v573
  %v576 = vpack.c.bf16 %v575, %v575
  %578 = vrot.lane.b32.xlu0 %v576, 32
  %v579 = vpop.permute.xlu0 %578
  %v581 = vsel %vm91, %v579, 0
  %583 = vmatpush.bf16.msra.mxu0 0
  %584 = vmatpush.bf16.msra.mxu0 0
  %585 = vmatpush.bf16.msra.mxu0 0
  %586 = vmatpush.bf16.msra.mxu0 0
  %587 = vmatpush.bf16.msra.mxu0 0
  %588 = vmatpush.bf16.msra.mxu0 0
  %589 = vmatpush.bf16.msra.mxu0 %v171
  %590 = vmatpush.bf16.msra.mxu0 %v170
  %591 = vmatmul.bf16.gmra.mxu0 %v581
  %v592 = vpop.f32.mrf.mxu0
  %v593 = vadd.f32 0.0, %v592
  %v594 = vpop.f32.mrf.mxu0
  %595 = vdwg.mxu0
  %v596 = vadd.f32 %v155, %v593
  %v597 = vxor.u32 %v596, 2147483648
  %v598 = vmul.f32 %v597, 1.442695
  %v599 = vpow.pop %v598
  %v600 = vadd.f32 %v599, 1.0
  %v601 = vrcp.pop %v600
  %v602 = vmul.f32 %v600, %v601
  %v603 = vsub.f32 1.0, %v602
  %v604 = vmul.f32 %v601, %v603
  %v605 = vadd.f32 %v601, %v604
  %vm606 = vweird.f32 %v600
  %vm607 = vweird.f32 %v601
  %vm608 = vmor %vm606, %vm607
  %v609 = vsel %vm608, %v601, %v605
  %v610 = vand.u32 2147483647, %v600
  %vm611 = vcmp.eq.f32.partialorder %v610, 8.507059e+37
  %v612 = vand.u32 %v600, 2147483648
  %v613 = vor.u32 1.1754944e-38, %v612
  %v614 = vsel %vm611, %v613, %v609
  %v615 = vmul.f32 1.0, %v614
  %v616 = vtanh.pop %v596
  %v617 = vmul.f32 %v615, %v569
  %619 = vrot.lane.b32.xlu0 %v616, 96
  %v620 = vpop.permute.xlu0 %619
  %v622 = vmul.f32 %v615, %v620
  %624 = vrot.lane.b32.xlu0 %v622, 96
  %v625 = vpop.permute.xlu0 %624
  %v627 = vadd.f32 %v617, %v625
  %v628 = vtanh.pop %v627
  %630 = vrot.lane.b32.xlu0 %v628, 96
  %v631 = vpop.permute.xlu0 %630
  %v633 = vmul.f32 %v615, %v631
  %v634 = vld [vmem:[%s4] sm:$0x1]
  %v636 = vperm.slane %v634, 0
  %637 = vrot.lane.b32.xlu0 %v636, 96
  %v638 = vpop.permute.xlu0 %637
  %v640 = vmul.f32 %v633, %v638
  %642 = vrot.lane.b32.xlu0 %v640, 32
  %v643 = vpop.permute.xlu0 %642
  %v645 = vsel %vm91, %v643, 0.0
  %646 = vadd.xlane.f32.xlu0 %v645
  %v647 = vpop.xlane.xlu0 %646
  %v648 = vstv %s161
  %v649 = vadd.f32 %v647, %v648
  %vm650 = vcmask 7168
  %651 = vst.msk [vmem:[%s6] sm:$0xff] %vm650, %v649
  // Predicated region
  $region26: #{lstm_language_classifier.1} parent=0 // pred_check
    _
  $region27: #{lstm_language_classifier.1} parent=0 // pred_check_branch
    %653 = sbr.rel (0) target = $region29
  $region28: #{lstm_language_classifier.1} parent=0 // pred_region
    _
  $region29: #{lstm_language_classifier.1} parent=0 // pred_fallthru
    _
  // Predicated region
  $region30: #{lstm_language_classifier.1} parent=0 // pred_check
    _
  $region31: #{lstm_language_classifier.1} parent=0 // pred_check_branch
    %655 = sbr.rel (0) target = $region33
  $region32: #{lstm_language_classifier.1} parent=0 // pred_region
    _
  $region33: #{lstm_language_classifier.1} parent=0 // pred_fallthru
    _

</llo_original>
